<compile_context>
chip_gen: v7x
topology: tpu7x:2x2x1
jax: 0.10.0
libtpu: 0.0.40
codegen_flags: <defaults>
</compile_context>

<pallas_src>
import math
from typing import NamedTuple, Optional, Tuple

import jax
import jax.numpy as jnp
from jax import lax
from jax.experimental import pallas as pl
from jax.experimental.pallas import tpu as pltpu


class CobaLIFParameters(NamedTuple):
    tau_syn_exc_inv: float = 1.0 / 5
    tau_syn_inh_inv: float = 1.0 / 5
    c_m_inv: float = 1.0 / 0.2
    g_l: float = (1.0 / 20) * (1.0 / 0.2)
    e_rev_I: float = -100.0
    e_rev_E: float = 60.0
    v_rest: float = -20.0
    v_reset: float = -70.0
    v_thresh: float = -10.0
    method: str = "super"
    alpha: float = 100.0


class CobaLIFFeedForwardState(NamedTuple):
    v: jnp.ndarray
    g_e: jnp.ndarray
    g_i: jnp.ndarray


_LANE = 256            # lane-dense last dim (multiple of 128)
_SUBLANE = 8           # f32 sublane alignment
_MAX_TILE_ROWS = 1024  # cap per-block rows


def _round_up(a: int, b: int) -> int:
    return -(-a // b) * b


def _row_align(*dtypes) -> int:
    """Second-to-last dim alignment: 8 for 4-byte, 16 for 2-byte, 32 for 1-byte."""
    align = _SUBLANE
    for d in dtypes:
        it = jnp.dtype(d).itemsize
        align = max(align, _SUBLANE * max(1, 4 // it))
    return align


def _vmem_budget_bytes() -> int:
    """Chip-aware scoped-VMEM budget with headroom for XLA's own scratch."""
    cap = 64 * 1024 * 1024
    try:
        info = pltpu.get_tpu_info()
        cap = int(getattr(info, "vmem_capacity_bytes", cap))
    except Exception:
        pass
    return max(16 * 1024 * 1024, min(int(cap * 0.6), 48 * 1024 * 1024))


def _pick_tile_rows(rows: int, row_align: int, live_blocks: int, budget: int) -> int:
    """Largest tile-row count s.t. `live_blocks` f32 (tr, 256) blocks fit `budget`."""
    per_row_bytes = _LANE * 4
    tr_cap = max(row_align, budget // (live_blocks * per_row_bytes))
    tr_cap = min(tr_cap, _MAX_TILE_ROWS)
    # v7x megacore: keep >= 2 grid steps along the parallel row axis when possible.
    if rows >= 2 * row_align:
        tr_cap = min(tr_cap, max(row_align, (rows // 2) // row_align * row_align))
    tr = min(rows, tr_cap)
    return max(row_align, tr // row_align * row_align)


def _fold_constants(p: CobaLIFParameters, dt: float):
    return (float(-dt * p.tau_syn_exc_inv),   # neg_dt_tau_e
            float(-dt * p.tau_syn_inh_inv),   # neg_dt_tau_i
            float(dt * p.c_m_inv),            # dt_cm
            float(p.g_l),
            float(p.v_rest), float(p.v_reset), float(p.v_thresh),
            float(p.e_rev_E), float(p.e_rev_I))


def _lif_update(x, v, g_e, g_i, c):
    """One CoBa-LIF step in the exact op order of the PyTorch source."""
    (nde, ndi, dt_cm, g_l, v_rest, v_reset, v_thresh, e_rev_E, e_rev_I) = c
    g_e = g_e + jnp.maximum(x, 0.0)
    g_i = g_i + jnp.maximum(-x, 0.0)
    g_e = g_e + nde * g_e
    g_i = g_i + ndi * g_i
    dv = dt_cm * (g_l * (v_rest - v) + g_e * (e_rev_E - v) + g_i * (e_rev_I - v))
    v = v + dv
    # TODO(synk): the 'super' (SuperSpike, alpha) surrogate only affects the
    # backward pass; forward is the Heaviside step below. A custom_vjp with a
    # backward Pallas kernel would be needed for training.
    spike = (v - v_thresh) > 0.0
    v = jnp.where(spike, v_reset, v)
    return spike, v, g_e, g_i


# ---------------------------------------------------------------------------
# Single-step kernel
# ---------------------------------------------------------------------------
def _make_step_kernel(p: CobaLIFParameters, dt: float):
    c = _fold_constants(p, dt)

    def kernel(x_ref, v_ref, ge_ref, gi_ref, z_ref, vo_ref, geo_ref, gio_ref):
        x = x_ref[...].astype(jnp.float32)
        v = v_ref[...].astype(jnp.float32)
        g_e = ge_ref[...].astype(jnp.float32)
        g_i = gi_ref[...].astype(jnp.float32)
        spike, v, g_e, g_i = _lif_update(x, v, g_e, g_i, c)
        z_ref[...] = spike.astype(z_ref.dtype)
        vo_ref[...] = v.astype(vo_ref.dtype)
        geo_ref[...] = g_e.astype(geo_ref.dtype)
        gio_ref[...] = g_i.astype(gio_ref.dtype)

    return kernel


def coba_lif_step_pallas(
    x: jnp.ndarray,
    state: Optional[CobaLIFFeedForwardState] = None,
    p: CobaLIFParameters = CobaLIFParameters(),
    dt: float = 0.001,
) -> Tuple[jnp.ndarray, CobaLIFFeedForwardState]:
    """Single CoBa-LIF feed-forward step on an arbitrarily shaped float tensor.

    Note: this path is HBM-bound (8 streams, ~32 B/elem f32); prefer
    coba_lif_sequence_pallas when running many timesteps.
    """
    if state is None:
        zeros = jnp.zeros(x.shape, dtype=x.dtype)
        state = CobaLIFFeedForwardState(v=zeros, g_e=zeros, g_i=zeros)

    orig_shape = x.shape
    n = int(x.size)
    row_align = _row_align(x.dtype, state.v.dtype, state.g_e.dtype, state.g_i.dtype)
    rows_min = _round_up(max(1, -(-n // _LANE)), row_align)
    budget = _vmem_budget_bytes()
    # 8 HBM streams (4 in + 4 out), each double-buffered -> 16 live blocks.
    tr = _pick_tile_rows(rows_min, row_align, live_blocks=16, budget=budget)
    rows = _round_up(rows_min, tr)
    total = rows * _LANE

    def prep(a):
        flat = a.reshape(-1)
        if total != n:
            # TODO(synk): for ragged sizes this pad materializes an extra HBM
            # copy; an in-kernel masked tail (scalar-prefetched valid count)
            # would avoid it.
            flat = jnp.pad(flat, (0, total - n))
        return flat.reshape(rows, _LANE)

    x2, v2, ge2, gi2 = prep(x), prep(state.v), prep(state.g_e), prep(state.g_i)

    spec = pl.BlockSpec((tr, _LANE), lambda i: (i, 0))
    out_shapes = (
        jax.ShapeDtypeStruct((rows, _LANE), x.dtype),
        jax.ShapeDtypeStruct((rows, _LANE), state.v.dtype),
        jax.ShapeDtypeStruct((rows, _LANE), state.g_e.dtype),
        jax.ShapeDtypeStruct((rows, _LANE), state.g_i.dtype),
    )

    z2, vn2, gen2, gin2 = pl.pallas_call(
        _make_step_kernel(p, dt),
        out_shape=out_shapes,
        grid=(rows // tr,),
        in_specs=[spec, spec, spec, spec],
        out_specs=(spec, spec, spec, spec),
        input_output_aliases={1: 1, 2: 2, 3: 3},
        compiler_params=pltpu.CompilerParams(
            dimension_semantics=("parallel",),
            vmem_limit_bytes=budget,
        ),
    )(x2, v2, ge2, gi2)

    def unflatten(a):
        if total == n:
            return a.reshape(orig_shape)
        return a.reshape(-1)[:n].reshape(orig_shape)

    new_state = CobaLIFFeedForwardState(
        v=unflatten(vn2), g_e=unflatten(gen2), g_i=unflatten(gin2))
    return unflatten(z2), new_state


# ---------------------------------------------------------------------------
# Fused sequence kernel: T_BLK timesteps per grid step, state carried in
# registers inside an unrolled fori_loop and VMEM-resident across t blocks.
# ---------------------------------------------------------------------------
def _make_seq_kernel(p: CobaLIFParameters, dt: float, t_blk: int):
    c = _fold_constants(p, dt)

    def kernel(x_ref, v0_ref, ge0_ref, gi0_ref, z_ref, v_ref, ge_ref, gi_ref):
        tb = pl.program_id(1)

        @pl.when(tb == 0)
        def _():
            v_ref[...] = v0_ref[...]
            ge_ref[...] = ge0_ref[...]
            gi_ref[...] = gi0_ref[...]

        def body(t, carry):
            v, g_e, g_i = carry
            x = x_ref[t].astype(jnp.float32)
            spike, v, g_e, g_i = _lif_update(x, v, g_e, g_i, c)
            z_ref[t] = spike.astype(z_ref.dtype)
            return (v, g_e, g_i)

        carry0 = (v_ref[...].astype(jnp.float32),
                  ge_ref[...].astype(jnp.float32),
                  gi_ref[...].astype(jnp.float32))
        v, g_e, g_i = lax.fori_loop(0, t_blk, body, carry0, unroll=True)
        v_ref[...] = v.astype(v_ref.dtype)
        ge_ref[...] = g_e.astype(ge_ref.dtype)
        gi_ref[...] = g_i.astype(gi_ref.dtype)

    return kernel


def coba_lif_sequence_pallas(
    xs: jnp.ndarray,
    state: Optional[CobaLIFFeedForwardState] = None,
    p: CobaLIFParameters = CobaLIFParameters(),
    dt: float = 0.001,
    t_block: int = 4,
) -> Tuple[jnp.ndarray, CobaLIFFeedForwardState]:
    """Run T CoBa-LIF steps (xs: (T, *feature_shape)) in one fused kernel."""
    T = xs.shape[0]
    feat_shape = xs.shape[1:]
    n = int(math.prod(feat_shape)) if feat_shape else 1

    if state is None:
        zeros = jnp.zeros(feat_shape, dtype=xs.dtype)
        state = CobaLIFFeedForwardState(v=zeros, g_e=zeros, g_i=zeros)

    # Largest divisor of T that is <= t_block.
    t_blk = 1
    for d in range(min(max(1, t_block), T), 0, -1):
        if T % d == 0:
            t_blk = d
            break

    row_align = _row_align(xs.dtype, state.v.dtype)
    rows_min = _round_up(max(1, -(-n // _LANE)), row_align)
    budget = _vmem_budget_bytes()
    # live blocks ~ (x + z) * t_blk * 2 buffers + 3 state-in * 2 + 3 resident state-out
    live_blocks = 4 * t_blk + 9
    tr = _pick_tile_rows(rows_min, row_align, live_blocks=live_blocks, budget=budget)
    rows = _round_up(rows_min, tr)
    total = rows * _LANE

    xs_flat = xs.reshape(T, n)
    if total != n:
        # Single pad over the whole sequence (done once, not per timestep).
        xs_flat = jnp.pad(xs_flat, ((0, 0), (0, total - n)))
    xs3 = xs_flat.reshape(T, rows, _LANE)

    def prep(a):
        flat = a.reshape(-1)
        if total != n:
            flat = jnp.pad(flat, (0, total - n))
        return flat.reshape(rows, _LANE)

    v2, ge2, gi2 = prep(state.v), prep(state.g_e), prep(state.g_i)

    x_spec = pl.BlockSpec((t_blk, tr, _LANE), lambda i, tb: (tb, i, 0))
    s_spec = pl.BlockSpec((tr, _LANE), lambda i, tb: (i, 0))

    out_shapes = (
        jax.ShapeDtypeStruct((T, rows, _LANE), xs.dtype),        # zs
        jax.ShapeDtypeStruct((rows, _LANE), state.v.dtype),      # v
        jax.ShapeDtypeStruct((rows, _LANE), state.g_e.dtype),    # g_e
        jax.ShapeDtypeStruct((rows, _LANE), state.g_i.dtype),    # g_i
    )

    zs3, vn2, gen2, gin2 = pl.pallas_call(
        _make_seq_kernel(p, dt, t_blk),
        out_shape=out_shapes,
        grid=(rows // tr, T // t_blk),
        in_specs=[x_spec, s_spec, s_spec, s_spec],
        out_specs=(x_spec, s_spec, s_spec, s_spec),
        input_output_aliases={1: 1, 2: 2, 3: 3},
        compiler_params=pltpu.CompilerParams(
            dimension_semantics=("parallel", "arbitrary"),
            vmem_limit_bytes=budget,
        ),
    )(xs3, v2, ge2, gi2)

    if total == n:
        zs = zs3.reshape((T,) + feat_shape)
    else:
        zs = zs3.reshape(T, -1)[:, :n].reshape((T,) + feat_shape)

    def unflatten(a):
        if total == n:
            return a.reshape(feat_shape)
        return a.reshape(-1)[:n].reshape(feat_shape)

    final_state = CobaLIFFeedForwardState(
        v=unflatten(vn2), g_e=unflatten(gen2), g_i=unflatten(gin2))
    return zs, final_state


# ---------------------------------------------------------------------------
# Pure-JAX reference (literal translation of the PyTorch step)
# ---------------------------------------------------------------------------
def _reference_step(x, state, p: CobaLIFParameters, dt: float):
    g_e = state.g_e + jax.nn.relu(x)
    g_i = state.g_i + jax.nn.relu(-x)
    dg_e = -dt * p.tau_syn_exc_inv * g_e
    g_e = g_e + dg_e
    dg_i = -dt * p.tau_syn_inh_inv * g_i
    g_i = g_i + dg_i
    dv = dt * p.c_m_inv * (
        p.g_l * (p.v_rest - state.v)
        + g_e * (p.e_rev_E - state.v)
        + g_i * (p.e_rev_I - state.v))
    v_pre = state.v + dv
    z = (v_pre - p.v_thresh > 0).astype(x.dtype)
    v = (1.0 - z) * v_pre + z * p.v_reset
    return z, CobaLIFFeedForwardState(v, g_e, g_i), v_pre


if __name__ == "__main__":
    key = jax.random.PRNGKey(0)
    B, C, H, W = 2, 4, 16, 16
    T = 8
    k1, k2 = jax.random.split(key)
    p = CobaLIFParameters()
    dt = 0.001

    # Scale input so both spiking and non-spiking neurons occur after one step.
    x = jax.random.normal(k1, (B, C, H, W), dtype=jnp.float32) * 100.0

    # ---- single-step kernel vs. pure-JAX reference ----
    z, new_state = coba_lif_step_pallas(x, None, p, dt)
    z = jax.block_until_ready(z)
    jax.block_until_ready(new_state.v)

    zeros = jnp.zeros_like(x)
    ref_z, ref_state, ref_vpre = _reference_step(
        x, CobaLIFFeedForwardState(zeros, zeros, zeros), p, dt)

    # Spikes must match except for elements whose pre-reset membrane potential
    # lies within FP-rounding distance of the threshold.
    near_thresh = jnp.abs(ref_vpre - p.v_thresh) < 1e-3
    assert bool(jnp.all((z == ref_z) | near_thresh)), "spike mismatch"

    sel = z == ref_z
    assert bool(jnp.allclose(jnp.where(sel, new_state.v, 0.0),
                             jnp.where(sel, ref_state.v, 0.0),
                             rtol=1e-5, atol=1e-4)), "v mismatch"
    assert bool(jnp.allclose(new_state.g_e, ref_state.g_e, rtol=1e-5, atol=1e-4)), "g_e mismatch"
    assert bool(jnp.allclose(new_state.g_i, ref_state.g_i, rtol=1e-5, atol=1e-4)), "g_i mismatch"

    # ---- fused time-loop kernel vs. chained single-step kernel ----
    xs = jax.random.normal(k2, (T, B, C, H, W), dtype=jnp.float32) * 100.0
    zs_fused, final_state = coba_lif_sequence_pallas(xs, None, p, dt)
    jax.block_until_ready(zs_fused)
    jax.block_until_ready(final_state.v)

    st = None
    zs_steps = []
    for t in range(T):
        z_t, st = coba_lif_step_pallas(xs[t], st, p, dt)
        zs_steps.append(z_t)
    zs_steps = jnp.stack(zs_steps)

    assert bool(jnp.allclose(zs_fused, zs_steps, rtol=1e-5, atol=1e-4)), "sequence spike mismatch"
    assert bool(jnp.allclose(final_state.v, st.v, rtol=1e-5, atol=1e-3)), "sequence v mismatch"
    assert bool(jnp.allclose(final_state.g_e, st.g_e, rtol=1e-5, atol=1e-3)), "sequence g_e mismatch"
    assert bool(jnp.allclose(final_state.g_i, st.g_i, rtol=1e-5, atol=1e-3)), "sequence g_i mismatch"

    print("KERNEL_OK")
</pallas_src>

<mosaic_0001>
module attributes {stable_mosaic.version = 11 : i64} {
  func.func @kernel(%arg0: i32, %arg1: memref<8x256xf32, #tpu.memory_space<vmem>>, %arg2: memref<8x256xf32, #tpu.memory_space<vmem>>, %arg3: memref<8x256xf32, #tpu.memory_space<vmem>>, %arg4: memref<8x256xf32, #tpu.memory_space<vmem>>, %arg5: memref<8x256xf32, #tpu.memory_space<vmem>>, %arg6: memref<8x256xf32, #tpu.memory_space<vmem>>, %arg7: memref<8x256xf32, #tpu.memory_space<vmem>>, %arg8: memref<8x256xf32, #tpu.memory_space<vmem>>) attributes {dimension_semantics = [#tpu.dimension_semantics<parallel>], iteration_bounds = array<i64: 1>, scalar_prefetch = 0 : i64, scratch_operands = 0 : i64, tpu.core_type = #tpu.core_type<tc>, window_params = [{transform_indices = @transform_0, window_bounds = array<i64: 8, 256>}, {transform_indices = @transform_1, window_bounds = array<i64: 8, 256>}, {transform_indices = @transform_2, window_bounds = array<i64: 8, 256>}, {transform_indices = @transform_3, window_bounds = array<i64: 8, 256>}, {transform_indices = @transform_4, window_bounds = array<i64: 8, 256>}, {transform_indices = @transform_5, window_bounds = array<i64: 8, 256>}, {transform_indices = @transform_6, window_bounds = array<i64: 8, 256>}, {transform_indices = @transform_7, window_bounds = array<i64: 8, 256>}]} {
    %c0 = arith.constant 0 : index
    %c0_0 = arith.constant 0 : index
    %0 = vector.load %arg1[%c0, %c0_0] : memref<8x256xf32, #tpu.memory_space<vmem>>, vector<8x256xf32>
    %c0_1 = arith.constant 0 : index
    %c0_2 = arith.constant 0 : index
    %1 = vector.load %arg2[%c0_1, %c0_2] : memref<8x256xf32, #tpu.memory_space<vmem>>, vector<8x256xf32>
    %c0_3 = arith.constant 0 : index
    %c0_4 = arith.constant 0 : index
    %2 = vector.load %arg3[%c0_3, %c0_4] : memref<8x256xf32, #tpu.memory_space<vmem>>, vector<8x256xf32>
    %c0_5 = arith.constant 0 : index
    %c0_6 = arith.constant 0 : index
    %3 = vector.load %arg4[%c0_5, %c0_6] : memref<8x256xf32, #tpu.memory_space<vmem>>, vector<8x256xf32>
    %cst = arith.constant 0.000000e+00 : f32
    %4 = vector.broadcast %cst : f32 to vector<8x256xf32>
    %5 = arith.maximumf %0, %4 : vector<8x256xf32>
    %6 = arith.addf %2, %5 : vector<8x256xf32>
    %cst_7 = arith.constant 0.000000e+00 : f32
    %7 = vector.broadcast %cst_7 : f32 to vector<8x256xf32>
    %8 = arith.subf %7, %0 : vector<8x256xf32>
    %cst_8 = arith.constant 0.000000e+00 : f32
    %9 = vector.broadcast %cst_8 : f32 to vector<8x256xf32>
    %10 = arith.maximumf %8, %9 : vector<8x256xf32>
    %11 = arith.addf %3, %10 : vector<8x256xf32>
    %cst_9 = arith.constant -2.000000e-04 : f32
    %12 = vector.broadcast %cst_9 : f32 to vector<8x256xf32>
    %13 = arith.mulf %12, %6 : vector<8x256xf32>
    %14 = arith.addf %6, %13 : vector<8x256xf32>
    %cst_10 = arith.constant -2.000000e-04 : f32
    %15 = vector.broadcast %cst_10 : f32 to vector<8x256xf32>
    %16 = arith.mulf %15, %11 : vector<8x256xf32>
    %17 = arith.addf %11, %16 : vector<8x256xf32>
    %cst_11 = arith.constant -2.000000e+01 : f32
    %18 = vector.broadcast %cst_11 : f32 to vector<8x256xf32>
    %19 = arith.subf %18, %1 : vector<8x256xf32>
    %cst_12 = arith.constant 2.500000e-01 : f32
    %20 = vector.broadcast %cst_12 : f32 to vector<8x256xf32>
    %21 = arith.mulf %20, %19 : vector<8x256xf32>
    %cst_13 = arith.constant 6.000000e+01 : f32
    %22 = vector.broadcast %cst_13 : f32 to vector<8x256xf32>
    %23 = arith.subf %22, %1 : vector<8x256xf32>
    %24 = arith.mulf %14, %23 : vector<8x256xf32>
    %25 = arith.addf %21, %24 : vector<8x256xf32>
    %cst_14 = arith.constant -1.000000e+02 : f32
    %26 = vector.broadcast %cst_14 : f32 to vector<8x256xf32>
    %27 = arith.subf %26, %1 : vector<8x256xf32>
    %28 = arith.mulf %17, %27 : vector<8x256xf32>
    %29 = arith.addf %25, %28 : vector<8x256xf32>
    %cst_15 = arith.constant 5.000000e-03 : f32
    %30 = vector.broadcast %cst_15 : f32 to vector<8x256xf32>
    %31 = arith.mulf %30, %29 : vector<8x256xf32>
    %32 = arith.addf %1, %31 : vector<8x256xf32>
    %cst_16 = arith.constant -1.000000e+01 : f32
    %33 = vector.broadcast %cst_16 : f32 to vector<8x256xf32>
    %34 = arith.subf %32, %33 : vector<8x256xf32>
    %cst_17 = arith.constant 0.000000e+00 : f32
    %35 = vector.broadcast %cst_17 : f32 to vector<8x256xf32>
    %36 = arith.cmpf ogt, %34, %35 : vector<8x256xf32>
    %cst_18 = arith.constant -7.000000e+01 : f32
    %37 = vector.broadcast %cst_18 : f32 to vector<8x256xf32>
    %38 = arith.select %36, %37, %32 : vector<8x256xi1>, vector<8x256xf32>
    %39 = arith.extui %36 : vector<8x256xi1> to vector<8x256xi32>
    %40 = arith.sitofp %39 : vector<8x256xi32> to vector<8x256xf32>
    %c0_19 = arith.constant 0 : index
    %c0_20 = arith.constant 0 : index
    %41 = vector.load %arg5[%c0_19, %c0_20] : memref<8x256xf32, #tpu.memory_space<vmem>>, vector<8x256xf32>
    tpu.vector_store %arg5[%c0_19, %c0_20], %40 {strides = array<i32>} : memref<8x256xf32, #tpu.memory_space<vmem>>, vector<8x256xf32>,
    %c0_21 = arith.constant 0 : index
    %c0_22 = arith.constant 0 : index
    %42 = vector.load %arg6[%c0_21, %c0_22] : memref<8x256xf32, #tpu.memory_space<vmem>>, vector<8x256xf32>
    tpu.vector_store %arg6[%c0_21, %c0_22], %38 {strides = array<i32>} : memref<8x256xf32, #tpu.memory_space<vmem>>, vector<8x256xf32>,
    %c0_23 = arith.constant 0 : index
    %c0_24 = arith.constant 0 : index
    %43 = vector.load %arg7[%c0_23, %c0_24] : memref<8x256xf32, #tpu.memory_space<vmem>>, vector<8x256xf32>
    tpu.vector_store %arg7[%c0_23, %c0_24], %14 {strides = array<i32>} : memref<8x256xf32, #tpu.memory_space<vmem>>, vector<8x256xf32>,
    %c0_25 = arith.constant 0 : index
    %c0_26 = arith.constant 0 : index
    %44 = vector.load %arg8[%c0_25, %c0_26] : memref<8x256xf32, #tpu.memory_space<vmem>>, vector<8x256xf32>
    tpu.vector_store %arg8[%c0_25, %c0_26], %17 {strides = array<i32>} : memref<8x256xf32, #tpu.memory_space<vmem>>, vector<8x256xf32>,
    return
  }
  func.func @transform_0(%arg0: i32) -> (i32, i32) {
    %c0_i32 = arith.constant 0 : i32
    %c0_i32_0 = arith.constant 0 : i32
    return %arg0, %c0_i32 : i32, i32
  }
  func.func @transform_1(%arg0: i32) -> (i32, i32) {
    %c0_i32 = arith.constant 0 : i32
    %c0_i32_0 = arith.constant 0 : i32
    return %arg0, %c0_i32 : i32, i32
  }
  func.func @transform_2(%arg0: i32) -> (i32, i32) {
    %c0_i32 = arith.constant 0 : i32
    %c0_i32_0 = arith.constant 0 : i32
    return %arg0, %c0_i32 : i32, i32
  }
  func.func @transform_3(%arg0: i32) -> (i32, i32) {
    %c0_i32 = arith.constant 0 : i32
    %c0_i32_0 = arith.constant 0 : i32
    return %arg0, %c0_i32 : i32, i32
  }
  func.func @transform_4(%arg0: i32) -> (i32, i32) {
    %c0_i32 = arith.constant 0 : i32
    %c0_i32_0 = arith.constant 0 : i32
    return %arg0, %c0_i32 : i32, i32
  }
  func.func @transform_5(%arg0: i32) -> (i32, i32) {
    %c0_i32 = arith.constant 0 : i32
    %c0_i32_0 = arith.constant 0 : i32
    return %arg0, %c0_i32 : i32, i32
  }
  func.func @transform_6(%arg0: i32) -> (i32, i32) {
    %c0_i32 = arith.constant 0 : i32
    %c0_i32_0 = arith.constant 0 : i32
    return %arg0, %c0_i32 : i32, i32
  }
  func.func @transform_7(%arg0: i32) -> (i32, i32) {
    %c0_i32 = arith.constant 0 : i32
    %c0_i32_0 = arith.constant 0 : i32
    return %arg0, %c0_i32 : i32, i32
  }
}

</mosaic_0001>

<llo_original>
// kernel: tpu_custom_call.1
$region0: #{tpu_custom_call.1}
  #allocation0 [shape = 'u32[]', space=smem, size = 0x4, offset = 0x4, fixed_abs, tag = 'smem constant byte address 0x4 - core index']
  #allocation1 [shape = 'u32[144,128]{1,0:T(1,128)}', space=vmem, size = 0x12000, scoped, tag = 'internal scratch']
  %s0 = inlined_call_operand.vmem [shape: f32[8,256], index: 0, kind: input, shape index: {}]
  %s1 = inlined_call_operand.hbm [shape: f32[8,256], index: 1, kind: input, shape index: {}, may-alias: {1,5}]
  %s2 = inlined_call_operand.hbm [shape: f32[8,256], index: 2, kind: input, shape index: {}, may-alias: {2,6}]
  %s3 = inlined_call_operand.hbm [shape: f32[8,256], index: 3, kind: input, shape index: {}, may-alias: {3,7}]
  %s4 = inlined_call_operand.hbm [shape: f32[8,256], index: 4, kind: output, shape index: {0}]
  %s5 = inlined_call_operand.hbm [shape: f32[8,256], index: 5, kind: output, shape index: {1}, may-alias: {1,5}]
  %s6 = inlined_call_operand.hbm [shape: f32[8,256], index: 6, kind: output, shape index: {2}, may-alias: {2,6}]
  %s7 = inlined_call_operand.hbm [shape: f32[8,256], index: 7, kind: output, shape index: {3}, may-alias: {3,7}]
  %8 = xla_tuple %s4, %s5, %s6, %s7
  %s9 = sld [smem:[#allocation0]]
  $region62: #{tpu_custom_call.1} parent=0
    _
  %s11 = ssub.s32 1, %s9
  %s12 = scalar_select 0, %s11, %s9
  $region1: #{tpu_custom_call.1} parent=0
    #allocation2 [shape = 'u8[8192]{0}', space=vmem, size = 0x2000, scoped, tag = 'input window, operand 1, single buffered']
    #allocation3 [shape = 's32[1]{0}', space=sflag, size = 0x4, scoped, tag = 'scoped memory for tpu_custom_call.1']
    #allocation4 [shape = 's32[1]{0}', space=sflag, size = 0x4, scoped, tag = 'scoped memory for tpu_custom_call.1']
    #allocation5 [shape = 'u8[8192]{0}', space=vmem, size = 0x2000, scoped, tag = 'input window, operand 2, single buffered']
    #allocation6 [shape = 's32[1]{0}', space=sflag, size = 0x4, scoped, tag = 'scoped memory for tpu_custom_call.1']
    #allocation7 [shape = 'u8[8192]{0}', space=vmem, size = 0x2000, scoped, tag = 'input window, operand 3, single buffered']
    #allocation8 [shape = 'u8[8192]{0}', space=vmem, size = 0x2000, scoped, tag = 'output window, operand 0, single buffered']
    #allocation9 [shape = 'u8[8192]{0}', space=vmem, size = 0x2000, scoped, tag = 'output window, operand 1, single buffered']
    #allocation10 [shape = 's32[1]{0}', space=sflag, size = 0x4, scoped, tag = 'scoped memory for tpu_custom_call.1']
    #allocation11 [shape = 'u8[8192]{0}', space=vmem, size = 0x2000, scoped, tag = 'output window, operand 2, single buffered']
    #allocation12 [shape = 'u8[8192]{0}', space=vmem, size = 0x2000, scoped, tag = 'output window, operand 3, single buffered']
    #allocation13 [shape = 's32[1]{0}', space=sflag, size = 0x4, scoped, tag = 'scoped memory for tpu_custom_call.1']
    %13 = vsyncpa [#allocation3], 0
    %14 = vsyncpa [#allocation6], 0
    %15 = vsyncpa [#allocation4], 0
    %16 = vsyncpa [#allocation10], 0
    %17 = vsyncpa [#allocation13], 0
    // Predicated region
    $region2: #{tpu_custom_call.1} parent=1 // pred_check
      _
    $region3: #{tpu_custom_call.1} parent=1 // pred_check_branch
      %19 = sbr.rel (0) target = $region5
    $region4: #{tpu_custom_call.1} parent=1 // pred_region
      _
    $region5: #{tpu_custom_call.1} parent=1 // pred_fallthru
      _
    // Predicated region
    $region6: #{tpu_custom_call.1} parent=1 // pred_check
      _
    $region7: #{tpu_custom_call.1} parent=1 // pred_check_branch
      %21 = sbr.rel (0) target = $region9
    $region8: #{tpu_custom_call.1} parent=1 // pred_region
      %s23 = ssub.s32 256, 256
      %24 = vsyncadd [#allocation3], %s23
      %s26 = sshll.u32 [#allocation2], 4
      %s27 = int_to_ptr.vmem [resolvable:$true] %s26
      %29 = dma.hbm_to_vmem [thread:$0]  %s1, 256, %s27, [#allocation3]
    $region9: #{tpu_custom_call.1} parent=1 // pred_fallthru
      _
    // Predicated region
    $region10: #{tpu_custom_call.1} parent=1 // pred_check
      _
    $region11: #{tpu_custom_call.1} parent=1 // pred_check_branch
      %31 = sbr.rel (0) target = $region13
    $region12: #{tpu_custom_call.1} parent=1 // pred_region
      %s33 = ssub.s32 256, 256
      %34 = vsyncadd [#allocation6], %s33
      %s36 = sshll.u32 [#allocation5], 4
      %s37 = int_to_ptr.vmem [resolvable:$true] %s36
      %39 = dma.hbm_to_vmem [thread:$0]  %s2, 256, %s37, [#allocation6]
    $region13: #{tpu_custom_call.1} parent=1 // pred_fallthru
      _
    // Predicated region
    $region14: #{tpu_custom_call.1} parent=1 // pred_check
      _
    $region15: #{tpu_custom_call.1} parent=1 // pred_check_branch
      %41 = sbr.rel (0) target = $region17
    $region16: #{tpu_custom_call.1} parent=1 // pred_region
      %s43 = ssub.s32 256, 256
      %44 = vsyncadd [#allocation6], %s43
      %s46 = sshll.u32 [#allocation7], 4
      %s47 = int_to_ptr.vmem [resolvable:$true] %s46
      %49 = dma.hbm_to_vmem [thread:$0]  %s3, 256, %s47, [#allocation6]
    $region17: #{tpu_custom_call.1} parent=1 // pred_fallthru
      _
    // Predicated region
    $region18: #{tpu_custom_call.1} parent=1 // pred_check
      _
    $region19: #{tpu_custom_call.1} parent=1 // pred_check_branch
      %51 = sbr.rel (0) target = $region21
    $region20: #{tpu_custom_call.1} parent=1 // pred_region
      %52 = dma.done [#allocation3], 256
    $region21: #{tpu_custom_call.1} parent=1 // pred_fallthru
      _
    // Predicated region
    $region22: #{tpu_custom_call.1} parent=1 // pred_check
      _
    $region23: #{tpu_custom_call.1} parent=1 // pred_check_branch
      %54 = sbr.rel (0) target = $region25
    $region24: #{tpu_custom_call.1} parent=1 // pred_region
      %55 = dma.done [#allocation6], 256
    $region25: #{tpu_custom_call.1} parent=1 // pred_fallthru
      _
    // Predicated region
    $region26: #{tpu_custom_call.1} parent=1 // pred_check
      _
    $region27: #{tpu_custom_call.1} parent=1 // pred_check_branch
      %57 = sbr.rel (0) target = $region29
    $region28: #{tpu_custom_call.1} parent=1 // pred_region
      %58 = dma.done [#allocation6], 256
    $region29: #{tpu_custom_call.1} parent=1 // pred_fallthru
      _
    %v59 = vld [vmem:[%s0] sm:$0xff]
    %v60 = vld [vmem:[%s0 + $0x8] sm:$0xff]
    %v61 = vld [vmem:[#allocation2] sm:$0xff]
    %v62 = vld [vmem:[#allocation2 + $0x8] sm:$0xff]
    %v63 = vld [vmem:[#allocation5] sm:$0xff]
    %v64 = vld [vmem:[#allocation5 + $0x8] sm:$0xff]
    %v65 = vld [vmem:[#allocation7] sm:$0xff]
    %v66 = vld [vmem:[#allocation7 + $0x8] sm:$0xff]
    %v67 = vmax.f32 %v59, 0.0
    %v68 = vmax.f32 %v60, 0.0
    %v69 = vadd.f32 %v63, %v67
    %v70 = vadd.f32 %v64, %v68
    %v71 = vsub.f32 0.0, %v59
    %v72 = vsub.f32 0.0, %v60
    %v73 = vmax.f32 %v71, 0.0
    %v74 = vmax.f32 %v72, 0.0
    %v75 = vadd.f32 %v65, %v73
    %v76 = vadd.f32 %v66, %v74
    %v77 = vmul.f32 %v69, -0.0002
    %v78 = vmul.f32 %v70, -0.0002
    %v79 = vadd.f32 %v69, %v77
    %v80 = vadd.f32 %v70, %v78
    %v81 = vmul.f32 %v75, -0.0002
    %v82 = vmul.f32 %v76, -0.0002
    %v83 = vadd.f32 %v75, %v81
    %v84 = vadd.f32 %v76, %v82
    %v85 = vsub.f32 -20.0, %v61
    %v86 = vsub.f32 -20.0, %v62
    %v87 = vmul.f32 %v85, 0.25
    %v88 = vmul.f32 %v86, 0.25
    %v89 = vsub.f32 60.0, %v61
    %v90 = vsub.f32 60.0, %v62
    %v91 = vmul.f32 %v79, %v89
    %v92 = vmul.f32 %v80, %v90
    %v93 = vadd.f32 %v87, %v91
    %v94 = vadd.f32 %v88, %v92
    %v95 = vsub.f32 -100.0, %v61
    %v96 = vsub.f32 -100.0, %v62
    %v97 = vmul.f32 %v83, %v95
    %v98 = vmul.f32 %v84, %v96
    %v99 = vadd.f32 %v93, %v97
    %v100 = vadd.f32 %v94, %v98
    %v101 = vmul.f32 %v99, 0.005
    %v102 = vmul.f32 %v100, 0.005
    %v103 = vadd.f32 %v61, %v101
    %v104 = vadd.f32 %v62, %v102
    %v105 = vsub.f32 %v103, -10.0
    %v106 = vsub.f32 %v104, -10.0
    %vm107 = vcmp.gt.f32.partialorder %v105, 0.0
    %vm108 = vcmp.gt.f32.partialorder %v106, 0.0
    %v109 = vsel %vm107, -70.0, %v103
    %v110 = vsel %vm108, -70.0, %v104
    %v111 = vsel %vm107, 1, 0
    %v112 = vsel %vm108, 1, 0
    %v113 = vcvt.s32.f32 %v111
    %v114 = vcvt.s32.f32 %v112
    %115 = vst [vmem:[#allocation8] sm:$0xff] %v113
    %116 = vst [vmem:[#allocation8 + $0x8] sm:$0xff] %v114
    %117 = vst [vmem:[#allocation9] sm:$0xff] %v109
    %118 = vst [vmem:[#allocation9 + $0x8] sm:$0xff] %v110
    %119 = vst [vmem:[#allocation11] sm:$0xff] %v79
    %120 = vst [vmem:[#allocation11 + $0x8] sm:$0xff] %v80
    %121 = vst [vmem:[#allocation12] sm:$0xff] %v83
    %122 = vst [vmem:[#allocation12 + $0x8] sm:$0xff] %v84
    // Predicated region
    $region30: #{tpu_custom_call.1} parent=1 // pred_check
      _
    $region31: #{tpu_custom_call.1} parent=1 // pred_check_branch
      %124 = sbr.rel (0) target = $region33
    $region32: #{tpu_custom_call.1} parent=1 // pred_region
      %s126 = ssub.s32 256, 256
      %127 = vsyncadd [#allocation4], %s126
      %s129 = sshll.u32 [#allocation8], 4
      %s130 = int_to_ptr.vmem [resolvable:$true] %s129
      %132 = dma.vmem_to_hbm [thread:$0]  %s130, 256, %s4, [#allocation4]
    $region33: #{tpu_custom_call.1} parent=1 // pred_fallthru
      _
    // Predicated region
    $region34: #{tpu_custom_call.1} parent=1 // pred_check
      _
    $region35: #{tpu_custom_call.1} parent=1 // pred_check_branch
      %134 = sbr.rel (0) target = $region37
    $region36: #{tpu_custom_call.1} parent=1 // pred_region
      %s136 = ssub.s32 256, 256
      %137 = vsyncadd [#allocation10], %s136
      %s139 = sshll.u32 [#allocation9], 4
      %s140 = int_to_ptr.vmem [resolvable:$true] %s139
      %142 = dma.vmem_to_hbm [thread:$0]  %s140, 256, %s5, [#allocation10]
    $region37: #{tpu_custom_call.1} parent=1 // pred_fallthru
      _
    // Predicated region
    $region38: #{tpu_custom_call.1} parent=1 // pred_check
      _
    $region39: #{tpu_custom_call.1} parent=1 // pred_check_branch
      %144 = sbr.rel (0) target = $region41
    $region40: #{tpu_custom_call.1} parent=1 // pred_region
      %s146 = ssub.s32 256, 256
      %147 = vsyncadd [#allocation10], %s146
      %s149 = sshll.u32 [#allocation11], 4
      %s150 = int_to_ptr.vmem [resolvable:$true] %s149
      %152 = dma.vmem_to_hbm [thread:$0]  %s150, 256, %s6, [#allocation10]
    $region41: #{tpu_custom_call.1} parent=1 // pred_fallthru
      _
    // Predicated region
    $region42: #{tpu_custom_call.1} parent=1 // pred_check
      _
    $region43: #{tpu_custom_call.1} parent=1 // pred_check_branch
      %154 = sbr.rel (0) target = $region45
    $region44: #{tpu_custom_call.1} parent=1 // pred_region
      %s156 = ssub.s32 256, 256
      %157 = vsyncadd [#allocation13], %s156
      %s159 = sshll.u32 [#allocation12], 4
      %s160 = int_to_ptr.vmem [resolvable:$true] %s159
      %162 = dma.vmem_to_hbm [thread:$0]  %s160, 256, %s7, [#allocation13]
    $region45: #{tpu_custom_call.1} parent=1 // pred_fallthru
      _
    // Predicated region
    $region46: #{tpu_custom_call.1} parent=1 // pred_check
      _
    $region47: #{tpu_custom_call.1} parent=1 // pred_check_branch
      %164 = sbr.rel (0) target = $region49
    $region48: #{tpu_custom_call.1} parent=1 // pred_region
      %165 = dma.done [#allocation4], 256
    $region49: #{tpu_custom_call.1} parent=1 // pred_fallthru
      _
    // Predicated region
    $region50: #{tpu_custom_call.1} parent=1 // pred_check
      _
    $region51: #{tpu_custom_call.1} parent=1 // pred_check_branch
      %167 = sbr.rel (0) target = $region53
    $region52: #{tpu_custom_call.1} parent=1 // pred_region
      %168 = dma.done [#allocation10], 256
    $region53: #{tpu_custom_call.1} parent=1 // pred_fallthru
      _
    // Predicated region
    $region54: #{tpu_custom_call.1} parent=1 // pred_check
      _
    $region55: #{tpu_custom_call.1} parent=1 // pred_check_branch
      %170 = sbr.rel (0) target = $region57
    $region56: #{tpu_custom_call.1} parent=1 // pred_region
      %171 = dma.done [#allocation10], 256
    $region57: #{tpu_custom_call.1} parent=1 // pred_fallthru
      _
    // Predicated region
    $region58: #{tpu_custom_call.1} parent=1 // pred_check
      _
    $region59: #{tpu_custom_call.1} parent=1 // pred_check_branch
      %173 = sbr.rel (0) target = $region61
    $region60: #{tpu_custom_call.1} parent=1 // pred_region
      %174 = dma.done [#allocation13], 256
    $region61: #{tpu_custom_call.1} parent=1 // pred_fallthru
      _
    %175 = vsyncpa [#allocation3], 1
    %176 = vsyncpa [#allocation6], 1
    %177 = vsyncpa [#allocation4], 1
    %178 = vsyncpa [#allocation10], 1
    %179 = vsyncpa [#allocation13], 1

</llo_original>
